<compile_context>
chip_gen: v6e
topology: v6e:2x2x1
jax: 0.10.0
libtpu: 0.0.40
codegen_flags: <defaults>
</compile_context>

<pallas_src>
import functools
import math

import jax
import jax.numpy as jnp
from jax.experimental import pallas as pl
from jax.experimental.pallas import tpu as pltpu

_LANE = 128
_SUBLANE_MULTIPLE = 32       # f32 x8 / bf16 x16 / int8 x32 -> 32 covers all dtypes
_TARGET_MIN_ROW_TILE = 512   # ~85% of HBM roofline already reached by 512-1024 rows
_MIN_GRID_STEPS = 8          # keep pipelining + v7x 2-TC sharding effective


def _round_up(x: int, m: int) -> int:
    return ((x + m - 1) // m) * m


@functools.lru_cache(maxsize=None)
def _vmem_params():
    """(per-step tile budget bytes, scoped-vmem limit bytes), per TPU generation."""
    try:
        capacity = pltpu.get_tpu_info().vmem_capacity_bytes
    except Exception:  # no TPU info available -> assume the smallest (v7x, 64 MiB)
        capacity = 64 * 1024 * 1024
    budget = min(capacity // 4, 20 * 1024 * 1024)   # covers double-buffered tiles
    limit = min(capacity // 2, 40 * 1024 * 1024)    # scoped-VMEM limit w/ headroom
    return budget, limit


def _compiler_params():
    _, limit = _vmem_params()
    return pltpu.CompilerParams(
        dimension_semantics=("parallel",),
        vmem_limit_bytes=limit,
    )


def _row_tile(M: int, bytes_per_row_per_step: int, alignment: int) -> int:
    """Row tile: big enough for DMA efficiency, small enough that the grid keeps
    >= ~_MIN_GRID_STEPS steps (real double-buffering; lets v7x use both TCs)."""
    budget, _ = _vmem_params()
    vmem_rows = budget // max(1, 2 * bytes_per_row_per_step)   # 2x: double buffering
    target = max(_TARGET_MIN_ROW_TILE,
                 _round_up(-(-M // _MIN_GRID_STEPS), alignment))
    tm = min(vmem_rows, target)
    tm = max(alignment, (tm // alignment) * alignment)
    if tm >= M:
        return M   # tiny input: one full block; per-step overhead would dominate
    return tm


def _slice_kernel(x_ref, *out_refs):
    # Slice the (tm, D) tile along lanes in VMEM. When chunk % 128 == 0 the
    # slices are lane-aligned -> unmasked vst; otherwise masked stores (fallback).
    chunk = out_refs[0].shape[-1]
    for k, o_ref in enumerate(out_refs):
        o_ref[...] = x_ref[:, k * chunk:(k + 1) * chunk]


def _fold_kernel(x_ref, *out_refs):
    # Narrow-chunk path: fold rows into lanes (XLU relayout, idle in a copy
    # kernel) so each output tile is a lane-dense (tm*chunk//128, 128) slab.
    n = len(out_refs)
    chunk = x_ref.shape[-1] // n
    for k, o_ref in enumerate(out_refs):
        o_ref[...] = x_ref[:, k * chunk:(k + 1) * chunk].reshape(o_ref.shape)


def _split_rowwise(x2d, n: int, chunk: int, tm: int):
    """One multi-output call: contiguous (tm, D) row reads, n (tm, chunk) outputs."""
    M, D = x2d.shape
    itemsize = jnp.dtype(x2d.dtype).itemsize
    return pl.pallas_call(
        _slice_kernel,
        out_shape=tuple(jax.ShapeDtypeStruct((M, chunk), x2d.dtype) for _ in range(n)),
        grid=(pl.cdiv(M, tm),),
        in_specs=[pl.BlockSpec((tm, D), lambda i: (i, 0))],
        out_specs=tuple(pl.BlockSpec((tm, chunk), lambda i: (i, 0)) for _ in range(n)),
        compiler_params=_compiler_params(),
        cost_estimate=pl.CostEstimate(flops=0, transcendentals=0,
                                      bytes_accessed=2 * M * D * itemsize),
    )(x2d)


def _split_lane_dense(x2d, n: int, chunk: int, tm: int):
    """Narrow-chunk path: outputs presented as lane-dense (M*chunk//128, 128)."""
    M, D = x2d.shape
    OM = (M * chunk) // _LANE
    om_tile = (tm * chunk) // _LANE
    itemsize = jnp.dtype(x2d.dtype).itemsize
    return pl.pallas_call(
        _fold_kernel,
        out_shape=tuple(jax.ShapeDtypeStruct((OM, _LANE), x2d.dtype) for _ in range(n)),
        grid=(pl.cdiv(M, tm),),
        in_specs=[pl.BlockSpec((tm, D), lambda i: (i, 0))],
        out_specs=tuple(pl.BlockSpec((om_tile, _LANE), lambda i: (i, 0)) for _ in range(n)),
        compiler_params=_compiler_params(),
        cost_estimate=pl.CostEstimate(flops=0, transcendentals=0,
                                      bytes_accessed=2 * M * D * itemsize),
    )(x2d)


@functools.lru_cache(maxsize=None)
def _lane_dense_fold_supported() -> bool:
    """One-time eager probe: does this Mosaic lower (and correctly compute) the
    sublane->lane fold reshape? If not, we keep the masked-store fallback."""
    try:
        x = jnp.arange(64 * 8, dtype=jnp.float32).reshape(64, 8)
        outs = _split_lane_dense(x, n=2, chunk=4, tm=64)
        refs = jnp.split(x, 2, axis=-1)
        return all(bool(jnp.all(o.reshape(r.shape) == r)) for o, r in zip(outs, refs))
    except Exception:
        return False


def split_hollow_linear(x, outputs_per_input: int):
    """Pallas implementation of SplitHollowLinear.forward.

    Returns a tuple of `outputs_per_input` arrays, each with the same shape as
    `x` except the last dim is x.shape[-1] // outputs_per_input.
    """
    orig_shape = x.shape
    D = orig_shape[-1]
    n = outputs_per_input
    # TODO(synk): torch.split returns a ragged final chunk when D % n != 0; only
    # the evenly divisible case (the intended use of this module) is supported.
    assert D % n == 0, "last dim must be divisible by outputs_per_input"
    chunk = D // n

    lead = orig_shape[:-1]
    M = math.prod(lead) if len(orig_shape) > 1 else 1
    x2d = x.reshape(M, D)
    itemsize = jnp.dtype(x.dtype).itemsize
    bytes_per_row = (D + n * chunk) * itemsize   # input row + all output rows

    if chunk % _LANE == 0:
        # Lane-aligned split: contiguous full-row reads, unmasked stores.
        tm = _row_tile(M, bytes_per_row, _SUBLANE_MULTIPLE)
        outs = _split_rowwise(x2d, n, chunk, tm)
        return tuple(o.reshape(*lead, chunk) for o in outs)

    if (M * chunk) % _LANE == 0 and _lane_dense_fold_supported():
        # Narrow chunk, lane-dense output slabs. Alignment makes every tiled
        # output block (tm*chunk//128, 128) sublane-legal and fold-exact.
        align = math.lcm(_SUBLANE_MULTIPLE,
                         (8 * _LANE) // math.gcd(chunk, 8 * _LANE))
        tm = _row_tile(M, bytes_per_row, align)
        outs = _split_lane_dense(x2d, n, chunk, tm)
        return tuple(o.reshape(*lead, chunk) for o in outs)

    # Safe fallback (any shape): slice in VMEM with masked narrow stores.
    tm = _row_tile(M, bytes_per_row, _SUBLANE_MULTIPLE)
    outs = _split_rowwise(x2d, n, chunk, tm)
    return tuple(o.reshape(*lead, chunk) for o in outs)


if __name__ == "__main__":
    outputs_per_input = 4
    key = jax.random.PRNGKey(0)
    k1, k2 = jax.random.split(key)

    # Case 1: spec-shaped input (chunk = 4 < 128 -> lane-dense fold path, or
    # the masked-store fallback if the fold reshape is unsupported).
    x1 = jax.random.normal(k1, (2, 4, 16, 16), dtype=jnp.float32)
    outs1 = jax.block_until_ready(split_hollow_linear(x1, outputs_per_input))
    refs1 = jnp.split(x1, outputs_per_input, axis=-1)
    assert len(outs1) == outputs_per_input
    for o, r in zip(outs1, refs1):
        assert o.shape == r.shape and o.dtype == r.dtype
        assert bool(jnp.all(o == r))

    # Case 2: lane-aligned split (chunk = 128 -> single multi-output call).
    x2 = jax.random.normal(k2, (2, 64, 512), dtype=jnp.float32)
    outs2 = jax.block_until_ready(split_hollow_linear(x2, outputs_per_input))
    refs2 = jnp.split(x2, outputs_per_input, axis=-1)
    assert len(outs2) == outputs_per_input
    for o, r in zip(outs2, refs2):
        assert o.shape == r.shape and o.dtype == r.dtype
        assert bool(jnp.all(o == r))

    print("KERNEL_OK")
</pallas_src>

<mosaic_0001>
module attributes {stable_mosaic.version = 11 : i64} {
  func.func @_fold_kernel(%arg0: i32, %arg1: memref<64x8xf32, #tpu.memory_space<vmem>>, %arg2: memref<2x128xf32, #tpu.memory_space<vmem>>, %arg3: memref<2x128xf32, #tpu.memory_space<vmem>>) attributes {dimension_semantics = [#tpu.dimension_semantics<parallel>], iteration_bounds = array<i64: 1>, scalar_prefetch = 0 : i64, scratch_operands = 0 : i64, tpu.core_type = #tpu.core_type<tc>, window_params = [{transform_indices = @transform_0, window_bounds = array<i64: 64, 8>}, {transform_indices = @transform_1, window_bounds = array<i64: 2, 128>}, {transform_indices = @transform_2, window_bounds = array<i64: 2, 128>}]} {
    %c0 = arith.constant 0 : index
    %c0_0 = arith.constant 0 : index
    %0 = vector.load %arg1[%c0, %c0_0] : memref<64x8xf32, #tpu.memory_space<vmem>>, vector<64x4xf32>
    %1 = vector.shape_cast %0 : vector<64x4xf32> to vector<2x128xf32>
    %c0_1 = arith.constant 0 : index
    %c0_2 = arith.constant 0 : index
    %2 = vector.load %arg2[%c0_1, %c0_2] : memref<2x128xf32, #tpu.memory_space<vmem>>, vector<2x128xf32>
    tpu.vector_store %arg2[%c0_1, %c0_2], %1 {strides = array<i32>} : memref<2x128xf32, #tpu.memory_space<vmem>>, vector<2x128xf32>,
    %c0_3 = arith.constant 0 : index
    %c4 = arith.constant 4 : index
    %3 = vector.load %arg1[%c0_3, %c4] : memref<64x8xf32, #tpu.memory_space<vmem>>, vector<64x4xf32>
    %4 = vector.shape_cast %3 : vector<64x4xf32> to vector<2x128xf32>
    %c0_4 = arith.constant 0 : index
    %c0_5 = arith.constant 0 : index
    %5 = vector.load %arg3[%c0_4, %c0_5] : memref<2x128xf32, #tpu.memory_space<vmem>>, vector<2x128xf32>
    tpu.vector_store %arg3[%c0_4, %c0_5], %4 {strides = array<i32>} : memref<2x128xf32, #tpu.memory_space<vmem>>, vector<2x128xf32>,
    return
  }
  func.func @transform_0(%arg0: i32) -> (i32, i32) {
    %c0_i32 = arith.constant 0 : i32
    %c0_i32_0 = arith.constant 0 : i32
    return %arg0, %c0_i32 : i32, i32
  }
  func.func @transform_1(%arg0: i32) -> (i32, i32) {
    %c0_i32 = arith.constant 0 : i32
    %c0_i32_0 = arith.constant 0 : i32
    return %arg0, %c0_i32 : i32, i32
  }
  func.func @transform_2(%arg0: i32) -> (i32, i32) {
    %c0_i32 = arith.constant 0 : i32
    %c0_i32_0 = arith.constant 0 : i32
    return %arg0, %c0_i32 : i32, i32
  }
}

module attributes {stable_mosaic.version = 11 : i64} {
  func.func @_slice_kernel(%arg0: i32, %arg1: memref<128x16xf32, #tpu.memory_space<vmem>>, %arg2: memref<128x4xf32, #tpu.memory_space<vmem>>, %arg3: memref<128x4xf32, #tpu.memory_space<vmem>>, %arg4: memref<128x4xf32, #tpu.memory_space<vmem>>, %arg5: memref<128x4xf32, #tpu.memory_space<vmem>>) attributes {dimension_semantics = [#tpu.dimension_semantics<parallel>], iteration_bounds = array<i64: 1>, scalar_prefetch = 0 : i64, scratch_operands = 0 : i64, tpu.core_type = #tpu.core_type<tc>, window_params = [{transform_indices = @transform_0, window_bounds = array<i64: 128, 16>}, {transform_indices = @transform_1, window_bounds = array<i64: 128, 4>}, {transform_indices = @transform_2, window_bounds = array<i64: 128, 4>}, {transform_indices = @transform_3, window_bounds = array<i64: 128, 4>}, {transform_indices = @transform_4, window_bounds = array<i64: 128, 4>}]} {
    %c0 = arith.constant 0 : index
    %c0_0 = arith.constant 0 : index
    %0 = vector.load %arg1[%c0, %c0_0] : memref<128x16xf32, #tpu.memory_space<vmem>>, vector<128x4xf32>
    %c0_1 = arith.constant 0 : index
    %c0_2 = arith.constant 0 : index
    %1 = vector.load %arg2[%c0_1, %c0_2] : memref<128x4xf32, #tpu.memory_space<vmem>>, vector<128x4xf32>
    tpu.vector_store %arg2[%c0_1, %c0_2], %0 {strides = array<i32>} : memref<128x4xf32, #tpu.memory_space<vmem>>, vector<128x4xf32>,
    %c0_3 = arith.constant 0 : index
    %c4 = arith.constant 4 : index
    %2 = vector.load %arg1[%c0_3, %c4] : memref<128x16xf32, #tpu.memory_space<vmem>>, vector<128x4xf32>
    %c0_4 = arith.constant 0 : index
    %c0_5 = arith.constant 0 : index
    %3 = vector.load %arg3[%c0_4, %c0_5] : memref<128x4xf32, #tpu.memory_space<vmem>>, vector<128x4xf32>
    tpu.vector_store %arg3[%c0_4, %c0_5], %2 {strides = array<i32>} : memref<128x4xf32, #tpu.memory_space<vmem>>, vector<128x4xf32>,
    %c0_6 = arith.constant 0 : index
    %c8 = arith.constant 8 : index
    %4 = vector.load %arg1[%c0_6, %c8] : memref<128x16xf32, #tpu.memory_space<vmem>>, vector<128x4xf32>
    %c0_7 = arith.constant 0 : index
    %c0_8 = arith.constant 0 : index
    %5 = vector.load %arg4[%c0_7, %c0_8] : memref<128x4xf32, #tpu.memory_space<vmem>>, vector<128x4xf32>
    tpu.vector_store %arg4[%c0_7, %c0_8], %4 {strides = array<i32>} : memref<128x4xf32, #tpu.memory_space<vmem>>, vector<128x4xf32>,
    %c0_9 = arith.constant 0 : index
    %c12 = arith.constant 12 : index
    %6 = vector.load %arg1[%c0_9, %c12] : memref<128x16xf32, #tpu.memory_space<vmem>>, vector<128x4xf32>
    %c0_10 = arith.constant 0 : index
    %c0_11 = arith.constant 0 : index
    %7 = vector.load %arg5[%c0_10, %c0_11] : memref<128x4xf32, #tpu.memory_space<vmem>>, vector<128x4xf32>
    tpu.vector_store %arg5[%c0_10, %c0_11], %6 {strides = array<i32>} : memref<128x4xf32, #tpu.memory_space<vmem>>, vector<128x4xf32>,
    return
  }
  func.func @transform_0(%arg0: i32) -> (i32, i32) {
    %c0_i32 = arith.constant 0 : i32
    %c0_i32_0 = arith.constant 0 : i32
    return %arg0, %c0_i32 : i32, i32
  }
  func.func @transform_1(%arg0: i32) -> (i32, i32) {
    %c0_i32 = arith.constant 0 : i32
    %c0_i32_0 = arith.constant 0 : i32
    return %arg0, %c0_i32 : i32, i32
  }
  func.func @transform_2(%arg0: i32) -> (i32, i32) {
    %c0_i32 = arith.constant 0 : i32
    %c0_i32_0 = arith.constant 0 : i32
    return %arg0, %c0_i32 : i32, i32
  }
  func.func @transform_3(%arg0: i32) -> (i32, i32) {
    %c0_i32 = arith.constant 0 : i32
    %c0_i32_0 = arith.constant 0 : i32
    return %arg0, %c0_i32 : i32, i32
  }
  func.func @transform_4(%arg0: i32) -> (i32, i32) {
    %c0_i32 = arith.constant 0 : i32
    %c0_i32_0 = arith.constant 0 : i32
    return %arg0, %c0_i32 : i32, i32
  }
}

</mosaic_0001>

<llo_original>
// kernel: tpu_custom_call.1
$region0: #{tpu_custom_call.1}
  #allocation0 [shape = 'u32[]', space=smem, size = 0x4, offset = 0x4, fixed_abs, tag = 'smem constant byte address 0x4 - core index']
  #allocation1 [shape = 'u32[144,128]{1,0:T(1,128)}', space=vmem, size = 0x12000, scoped, tag = 'internal scratch']
  %s0 = inlined_call_operand.vmem [shape: f32[128,16], index: 0, kind: input, shape index: {}]
  %s1 = inlined_call_operand.vmem [shape: f32[128,4], index: 1, kind: output, shape index: {0}]
  %s2 = inlined_call_operand.vmem [shape: f32[128,4], index: 2, kind: output, shape index: {1}]
  %s3 = inlined_call_operand.vmem [shape: f32[128,4], index: 3, kind: output, shape index: {2}]
  %s4 = inlined_call_operand.vmem [shape: f32[128,4], index: 4, kind: output, shape index: {3}]
  %5 = xla_tuple %s1, %s2, %s3, %s4
  %s6 = sld [smem:[#allocation0]]
  $region38: #{tpu_custom_call.1} parent=0
    _
  %s8 = ssub.s32 1, %s6
  %s9 = scalar_select 0, %s8, %s6
  // Predicated region
  $region2: #{tpu_custom_call.1} parent=0 // pred_check
    _
  $region3: #{tpu_custom_call.1} parent=0 // pred_check_branch
    %11 = sbr.rel (0) target = $region5
  $region4: #{tpu_custom_call.1} parent=0 // pred_region
    _
  $region5: #{tpu_custom_call.1} parent=0 // pred_fallthru
    _
  %v12 = vld [vmem:[%s0] sm:$0xff]
  %v13 = vld [vmem:[%s0 + $0x8] sm:$0xff]
  %v14 = vld [vmem:[%s0 + $0x10] sm:$0xff]
  %v15 = vld [vmem:[%s0 + $0x18] sm:$0xff]
  %v16 = vld [vmem:[%s0 + $0x20] sm:$0xff]
  %v17 = vld [vmem:[%s0 + $0x28] sm:$0xff]
  %v18 = vld [vmem:[%s0 + $0x30] sm:$0xff]
  %v19 = vld [vmem:[%s0 + $0x38] sm:$0xff]
  %v20 = vld [vmem:[%s0 + $0x40] sm:$0xff]
  %v21 = vld [vmem:[%s0 + $0x48] sm:$0xff]
  %v22 = vld [vmem:[%s0 + $0x50] sm:$0xff]
  %v23 = vld [vmem:[%s0 + $0x58] sm:$0xff]
  %v24 = vld [vmem:[%s0 + $0x60] sm:$0xff]
  %v25 = vld [vmem:[%s0 + $0x68] sm:$0xff]
  %v26 = vld [vmem:[%s0 + $0x70] sm:$0xff]
  %v27 = vld [vmem:[%s0 + $0x78] sm:$0xff]
  %vm28 = vcmask 31744
  %29 = vst.msk [vmem:[%s1] sm:$0xff] %vm28, %v12
  %30 = vst.msk [vmem:[%s1 + $0x8] sm:$0xff] %vm28, %v13
  %31 = vst.msk [vmem:[%s1 + $0x10] sm:$0xff] %vm28, %v14
  %32 = vst.msk [vmem:[%s1 + $0x18] sm:$0xff] %vm28, %v15
  %33 = vst.msk [vmem:[%s1 + $0x20] sm:$0xff] %vm28, %v16
  %34 = vst.msk [vmem:[%s1 + $0x28] sm:$0xff] %vm28, %v17
  %35 = vst.msk [vmem:[%s1 + $0x30] sm:$0xff] %vm28, %v18
  %36 = vst.msk [vmem:[%s1 + $0x38] sm:$0xff] %vm28, %v19
  %37 = vst.msk [vmem:[%s1 + $0x40] sm:$0xff] %vm28, %v20
  %38 = vst.msk [vmem:[%s1 + $0x48] sm:$0xff] %vm28, %v21
  %39 = vst.msk [vmem:[%s1 + $0x50] sm:$0xff] %vm28, %v22
  %40 = vst.msk [vmem:[%s1 + $0x58] sm:$0xff] %vm28, %v23
  %41 = vst.msk [vmem:[%s1 + $0x60] sm:$0xff] %vm28, %v24
  %42 = vst.msk [vmem:[%s1 + $0x68] sm:$0xff] %vm28, %v25
  %43 = vst.msk [vmem:[%s1 + $0x70] sm:$0xff] %vm28, %v26
  %44 = vst.msk [vmem:[%s1 + $0x78] sm:$0xff] %vm28, %v27
  %v45 = vld [vmem:[%s0] sm:$0xff]
  %v46 = vld [vmem:[%s0 + $0x8] sm:$0xff]
  %v47 = vld [vmem:[%s0 + $0x10] sm:$0xff]
  %v48 = vld [vmem:[%s0 + $0x18] sm:$0xff]
  %v49 = vld [vmem:[%s0 + $0x20] sm:$0xff]
  %v50 = vld [vmem:[%s0 + $0x28] sm:$0xff]
  %v51 = vld [vmem:[%s0 + $0x30] sm:$0xff]
  %v52 = vld [vmem:[%s0 + $0x38] sm:$0xff]
  %v53 = vld [vmem:[%s0 + $0x40] sm:$0xff]
  %v54 = vld [vmem:[%s0 + $0x48] sm:$0xff]
  %v55 = vld [vmem:[%s0 + $0x50] sm:$0xff]
  %v56 = vld [vmem:[%s0 + $0x58] sm:$0xff]
  %v57 = vld [vmem:[%s0 + $0x60] sm:$0xff]
  %v58 = vld [vmem:[%s0 + $0x68] sm:$0xff]
  %v59 = vld [vmem:[%s0 + $0x70] sm:$0xff]
  %v60 = vld [vmem:[%s0 + $0x78] sm:$0xff]
  %77 = vrot.lane.b32.xlu0 %v45, 124
  %v78 = vpop.permute.xlu0 %77
  %79 = vrot.lane.b32.xlu0 %v46, 124
  %v80 = vpop.permute.xlu0 %79
  %81 = vrot.lane.b32.xlu0 %v47, 124
  %v82 = vpop.permute.xlu0 %81
  %83 = vrot.lane.b32.xlu0 %v48, 124
  %v84 = vpop.permute.xlu0 %83
  %85 = vrot.lane.b32.xlu0 %v49, 124
  %v86 = vpop.permute.xlu0 %85
  %87 = vrot.lane.b32.xlu0 %v50, 124
  %v88 = vpop.permute.xlu0 %87
  %89 = vrot.lane.b32.xlu0 %v51, 124
  %v90 = vpop.permute.xlu0 %89
  %91 = vrot.lane.b32.xlu0 %v52, 124
  %v92 = vpop.permute.xlu0 %91
  %93 = vrot.lane.b32.xlu0 %v53, 124
  %v94 = vpop.permute.xlu0 %93
  %95 = vrot.lane.b32.xlu0 %v54, 124
  %v96 = vpop.permute.xlu0 %95
  %97 = vrot.lane.b32.xlu0 %v55, 124
  %v98 = vpop.permute.xlu0 %97
  %99 = vrot.lane.b32.xlu0 %v56, 124
  %v100 = vpop.permute.xlu0 %99
  %101 = vrot.lane.b32.xlu0 %v57, 124
  %v102 = vpop.permute.xlu0 %101
  %103 = vrot.lane.b32.xlu0 %v58, 124
  %v104 = vpop.permute.xlu0 %103
  %105 = vrot.lane.b32.xlu0 %v59, 124
  %v106 = vpop.permute.xlu0 %105
  %107 = vrot.lane.b32.xlu0 %v60, 124
  %v108 = vpop.permute.xlu0 %107
  %125 = vst.msk [vmem:[%s2] sm:$0xff] %vm28, %v78
  %126 = vst.msk [vmem:[%s2 + $0x8] sm:$0xff] %vm28, %v80
  %127 = vst.msk [vmem:[%s2 + $0x10] sm:$0xff] %vm28, %v82
  %128 = vst.msk [vmem:[%s2 + $0x18] sm:$0xff] %vm28, %v84
  %129 = vst.msk [vmem:[%s2 + $0x20] sm:$0xff] %vm28, %v86
  %130 = vst.msk [vmem:[%s2 + $0x28] sm:$0xff] %vm28, %v88
  %131 = vst.msk [vmem:[%s2 + $0x30] sm:$0xff] %vm28, %v90
  %132 = vst.msk [vmem:[%s2 + $0x38] sm:$0xff] %vm28, %v92
  %133 = vst.msk [vmem:[%s2 + $0x40] sm:$0xff] %vm28, %v94
  %134 = vst.msk [vmem:[%s2 + $0x48] sm:$0xff] %vm28, %v96
  %135 = vst.msk [vmem:[%s2 + $0x50] sm:$0xff] %vm28, %v98
  %136 = vst.msk [vmem:[%s2 + $0x58] sm:$0xff] %vm28, %v100
  %137 = vst.msk [vmem:[%s2 + $0x60] sm:$0xff] %vm28, %v102
  %138 = vst.msk [vmem:[%s2 + $0x68] sm:$0xff] %vm28, %v104
  %139 = vst.msk [vmem:[%s2 + $0x70] sm:$0xff] %vm28, %v106
  %140 = vst.msk [vmem:[%s2 + $0x78] sm:$0xff] %vm28, %v108
  %v141 = vld [vmem:[%s0] sm:$0xff]
  %v142 = vld [vmem:[%s0 + $0x8] sm:$0xff]
  %v143 = vld [vmem:[%s0 + $0x10] sm:$0xff]
  %v144 = vld [vmem:[%s0 + $0x18] sm:$0xff]
  %v145 = vld [vmem:[%s0 + $0x20] sm:$0xff]
  %v146 = vld [vmem:[%s0 + $0x28] sm:$0xff]
  %v147 = vld [vmem:[%s0 + $0x30] sm:$0xff]
  %v148 = vld [vmem:[%s0 + $0x38] sm:$0xff]
  %v149 = vld [vmem:[%s0 + $0x40] sm:$0xff]
  %v150 = vld [vmem:[%s0 + $0x48] sm:$0xff]
  %v151 = vld [vmem:[%s0 + $0x50] sm:$0xff]
  %v152 = vld [vmem:[%s0 + $0x58] sm:$0xff]
  %v153 = vld [vmem:[%s0 + $0x60] sm:$0xff]
  %v154 = vld [vmem:[%s0 + $0x68] sm:$0xff]
  %v155 = vld [vmem:[%s0 + $0x70] sm:$0xff]
  %v156 = vld [vmem:[%s0 + $0x78] sm:$0xff]
  %173 = vrot.lane.b32.xlu0 %v141, 120
  %v174 = vpop.permute.xlu0 %173
  %175 = vrot.lane.b32.xlu0 %v142, 120
  %v176 = vpop.permute.xlu0 %175
  %177 = vrot.lane.b32.xlu0 %v143, 120
  %v178 = vpop.permute.xlu0 %177
  %179 = vrot.lane.b32.xlu0 %v144, 120
  %v180 = vpop.permute.xlu0 %179
  %181 = vrot.lane.b32.xlu0 %v145, 120
  %v182 = vpop.permute.xlu0 %181
  %183 = vrot.lane.b32.xlu0 %v146, 120
  %v184 = vpop.permute.xlu0 %183
  %185 = vrot.lane.b32.xlu0 %v147, 120
  %v186 = vpop.permute.xlu0 %185
  %187 = vrot.lane.b32.xlu0 %v148, 120
  %v188 = vpop.permute.xlu0 %187
  %189 = vrot.lane.b32.xlu0 %v149, 120
  %v190 = vpop.permute.xlu0 %189
  %191 = vrot.lane.b32.xlu0 %v150, 120
  %v192 = vpop.permute.xlu0 %191
  %193 = vrot.lane.b32.xlu0 %v151, 120
  %v194 = vpop.permute.xlu0 %193
  %195 = vrot.lane.b32.xlu0 %v152, 120
  %v196 = vpop.permute.xlu0 %195
  %197 = vrot.lane.b32.xlu0 %v153, 120
  %v198 = vpop.permute.xlu0 %197
  %199 = vrot.lane.b32.xlu0 %v154, 120
  %v200 = vpop.permute.xlu0 %199
  %201 = vrot.lane.b32.xlu0 %v155, 120
  %v202 = vpop.permute.xlu0 %201
  %203 = vrot.lane.b32.xlu0 %v156, 120
  %v204 = vpop.permute.xlu0 %203
  %221 = vst.msk [vmem:[%s3] sm:$0xff] %vm28, %v174
  %222 = vst.msk [vmem:[%s3 + $0x8] sm:$0xff] %vm28, %v176
  %223 = vst.msk [vmem:[%s3 + $0x10] sm:$0xff] %vm28, %v178
  %224 = vst.msk [vmem:[%s3 + $0x18] sm:$0xff] %vm28, %v180
  %225 = vst.msk [vmem:[%s3 + $0x20] sm:$0xff] %vm28, %v182
  %226 = vst.msk [vmem:[%s3 + $0x28] sm:$0xff] %vm28, %v184
  %227 = vst.msk [vmem:[%s3 + $0x30] sm:$0xff] %vm28, %v186
  %228 = vst.msk [vmem:[%s3 + $0x38] sm:$0xff] %vm28, %v188
  %229 = vst.msk [vmem:[%s3 + $0x40] sm:$0xff] %vm28, %v190
  %230 = vst.msk [vmem:[%s3 + $0x48] sm:$0xff] %vm28, %v192
  %231 = vst.msk [vmem:[%s3 + $0x50] sm:$0xff] %vm28, %v194
  %232 = vst.msk [vmem:[%s3 + $0x58] sm:$0xff] %vm28, %v196
  %233 = vst.msk [vmem:[%s3 + $0x60] sm:$0xff] %vm28, %v198
  %234 = vst.msk [vmem:[%s3 + $0x68] sm:$0xff] %vm28, %v200
  %235 = vst.msk [vmem:[%s3 + $0x70] sm:$0xff] %vm28, %v202
  %236 = vst.msk [vmem:[%s3 + $0x78] sm:$0xff] %vm28, %v204
  %v237 = vld [vmem:[%s0] sm:$0xff]
  %v238 = vld [vmem:[%s0 + $0x8] sm:$0xff]
  %v239 = vld [vmem:[%s0 + $0x10] sm:$0xff]
  %v240 = vld [vmem:[%s0 + $0x18] sm:$0xff]
  %v241 = vld [vmem:[%s0 + $0x20] sm:$0xff]
  %v242 = vld [vmem:[%s0 + $0x28] sm:$0xff]
  %v243 = vld [vmem:[%s0 + $0x30] sm:$0xff]
  %v244 = vld [vmem:[%s0 + $0x38] sm:$0xff]
  %v245 = vld [vmem:[%s0 + $0x40] sm:$0xff]
  %v246 = vld [vmem:[%s0 + $0x48] sm:$0xff]
  %v247 = vld [vmem:[%s0 + $0x50] sm:$0xff]
  %v248 = vld [vmem:[%s0 + $0x58] sm:$0xff]
  %v249 = vld [vmem:[%s0 + $0x60] sm:$0xff]
  %v250 = vld [vmem:[%s0 + $0x68] sm:$0xff]
  %v251 = vld [vmem:[%s0 + $0x70] sm:$0xff]
  %v252 = vld [vmem:[%s0 + $0x78] sm:$0xff]
  %269 = vrot.lane.b32.xlu0 %v237, 116
  %v270 = vpop.permute.xlu0 %269
  %271 = vrot.lane.b32.xlu0 %v238, 116
  %v272 = vpop.permute.xlu0 %271
  %273 = vrot.lane.b32.xlu0 %v239, 116
  %v274 = vpop.permute.xlu0 %273
  %275 = vrot.lane.b32.xlu0 %v240, 116
  %v276 = vpop.permute.xlu0 %275
  %277 = vrot.lane.b32.xlu0 %v241, 116
  %v278 = vpop.permute.xlu0 %277
  %279 = vrot.lane.b32.xlu0 %v242, 116
  %v280 = vpop.permute.xlu0 %279
  %281 = vrot.lane.b32.xlu0 %v243, 116
  %v282 = vpop.permute.xlu0 %281
  %283 = vrot.lane.b32.xlu0 %v244, 116
  %v284 = vpop.permute.xlu0 %283
  %285 = vrot.lane.b32.xlu0 %v245, 116
  %v286 = vpop.permute.xlu0 %285
  %287 = vrot.lane.b32.xlu0 %v246, 116
  %v288 = vpop.permute.xlu0 %287
  %289 = vrot.lane.b32.xlu0 %v247, 116
  %v290 = vpop.permute.xlu0 %289
  %291 = vrot.lane.b32.xlu0 %v248, 116
  %v292 = vpop.permute.xlu0 %291
  %293 = vrot.lane.b32.xlu0 %v249, 116
  %v294 = vpop.permute.xlu0 %293
  %295 = vrot.lane.b32.xlu0 %v250, 116
  %v296 = vpop.permute.xlu0 %295
  %297 = vrot.lane.b32.xlu0 %v251, 116
  %v298 = vpop.permute.xlu0 %297
  %299 = vrot.lane.b32.xlu0 %v252, 116
  %v300 = vpop.permute.xlu0 %299
  %317 = vst.msk [vmem:[%s4] sm:$0xff] %vm28, %v270
  %318 = vst.msk [vmem:[%s4 + $0x8] sm:$0xff] %vm28, %v272
  %319 = vst.msk [vmem:[%s4 + $0x10] sm:$0xff] %vm28, %v274
  %320 = vst.msk [vmem:[%s4 + $0x18] sm:$0xff] %vm28, %v276
  %321 = vst.msk [vmem:[%s4 + $0x20] sm:$0xff] %vm28, %v278
  %322 = vst.msk [vmem:[%s4 + $0x28] sm:$0xff] %vm28, %v280
  %323 = vst.msk [vmem:[%s4 + $0x30] sm:$0xff] %vm28, %v282
  %324 = vst.msk [vmem:[%s4 + $0x38] sm:$0xff] %vm28, %v284
  %325 = vst.msk [vmem:[%s4 + $0x40] sm:$0xff] %vm28, %v286
  %326 = vst.msk [vmem:[%s4 + $0x48] sm:$0xff] %vm28, %v288
  %327 = vst.msk [vmem:[%s4 + $0x50] sm:$0xff] %vm28, %v290
  %328 = vst.msk [vmem:[%s4 + $0x58] sm:$0xff] %vm28, %v292
  %329 = vst.msk [vmem:[%s4 + $0x60] sm:$0xff] %vm28, %v294
  %330 = vst.msk [vmem:[%s4 + $0x68] sm:$0xff] %vm28, %v296
  %331 = vst.msk [vmem:[%s4 + $0x70] sm:$0xff] %vm28, %v298
  %332 = vst.msk [vmem:[%s4 + $0x78] sm:$0xff] %vm28, %v300
  // Predicated region
  $region6: #{tpu_custom_call.1} parent=0 // pred_check
    _
  $region7: #{tpu_custom_call.1} parent=0 // pred_check_branch
    %334 = sbr.rel (0) target = $region9
  $region8: #{tpu_custom_call.1} parent=0 // pred_region
    _
  $region9: #{tpu_custom_call.1} parent=0 // pred_fallthru
    _
  // Predicated region
  $region10: #{tpu_custom_call.1} parent=0 // pred_check
    _
  $region11: #{tpu_custom_call.1} parent=0 // pred_check_branch
    %336 = sbr.rel (0) target = $region13
  $region12: #{tpu_custom_call.1} parent=0 // pred_region
    _
  $region13: #{tpu_custom_call.1} parent=0 // pred_fallthru
    _
  // Predicated region
  $region14: #{tpu_custom_call.1} parent=0 // pred_check
    _
  $region15: #{tpu_custom_call.1} parent=0 // pred_check_branch
    %338 = sbr.rel (0) target = $region17
  $region16: #{tpu_custom_call.1} parent=0 // pred_region
    _
  $region17: #{tpu_custom_call.1} parent=0 // pred_fallthru
    _
  // Predicated region
  $region18: #{tpu_custom_call.1} parent=0 // pred_check
    _
  $region19: #{tpu_custom_call.1} parent=0 // pred_check_branch
    %340 = sbr.rel (0) target = $region21
  $region20: #{tpu_custom_call.1} parent=0 // pred_region
    _
  $region21: #{tpu_custom_call.1} parent=0 // pred_fallthru
    _
  // Predicated region
  $region22: #{tpu_custom_call.1} parent=0 // pred_check
    _
  $region23: #{tpu_custom_call.1} parent=0 // pred_check_branch
    %342 = sbr.rel (0) target = $region25
  $region24: #{tpu_custom_call.1} parent=0 // pred_region
    _
  $region25: #{tpu_custom_call.1} parent=0 // pred_fallthru
    _
  // Predicated region
  $region26: #{tpu_custom_call.1} parent=0 // pred_check
    _
  $region27: #{tpu_custom_call.1} parent=0 // pred_check_branch
    %344 = sbr.rel (0) target = $region29
  $region28: #{tpu_custom_call.1} parent=0 // pred_region
    _
  $region29: #{tpu_custom_call.1} parent=0 // pred_fallthru
    _
  // Predicated region
  $region30: #{tpu_custom_call.1} parent=0 // pred_check
    _
  $region31: #{tpu_custom_call.1} parent=0 // pred_check_branch
    %346 = sbr.rel (0) target = $region33
  $region32: #{tpu_custom_call.1} parent=0 // pred_region
    _
  $region33: #{tpu_custom_call.1} parent=0 // pred_fallthru
    _
  // Predicated region
  $region34: #{tpu_custom_call.1} parent=0 // pred_check
    _
  $region35: #{tpu_custom_call.1} parent=0 // pred_check_branch
    %348 = sbr.rel (0) target = $region37
  $region36: #{tpu_custom_call.1} parent=0 // pred_region
    _
  $region37: #{tpu_custom_call.1} parent=0 // pred_fallthru
    _

</llo_original>
